<compile_context>
chip_gen: v6e
topology: v6e:2x2x1
jax: 0.10.0
libtpu: 0.0.40
codegen_flags: <defaults>
</compile_context>

<pallas_src>
import functools

import numpy as np
import jax
import jax.numpy as jnp
from jax.experimental import pallas as pl
from jax.experimental.pallas import tpu as pltpu

_LANE = 128
_ROW = 16          # row-tile alignment (safe for bf16 (16,128) packing)
_TH_CAP = 2048     # max streamed hidden-tile width


def _round_up(a, b):
    return (a + b - 1) // b * b


def _vmem_budget_and_cap():
    """Generation-aware VMEM budget: physical capacity minus 25% headroom."""
    try:
        cap = int(pltpu.get_tpu_info().vmem_capacity_bytes)
    except Exception:
        cap = 64 << 20                     # conservative fallback (v7x per-TC)
    return cap - cap // 4, cap


def _spec(shape, index_map, buffers=None):
    """BlockSpec, optionally with an explicit buffer count (Buffered(1) for
    constant-index operands so Pallas doesn't allocate a wasted second buffer)."""
    if buffers is not None and hasattr(pl, "Buffered"):
        try:
            return pl.BlockSpec(shape, index_map, pipeline_mode=pl.Buffered(buffers))
        except TypeError:                  # older BlockSpec without pipeline_mode
            pass
    return pl.BlockSpec(shape, index_map)


def transformer_block_kernel(
    q_ref, k_ref, v_ref,
    g1_ref, be1_ref,
    w1_ref, b1_ref,
    w2_ref, b2_ref,
    g2_ref, be2_ref,
    o_ref,
    x_scr, h_scr, acc_scr,
    *, true_k: int, padded_k: int, eps: float = 1e-5,
):
    f32 = jnp.float32
    hj = pl.program_id(1)
    needs_mask = true_k != padded_k        # static Python bool
    inv_k = 1.0 / true_k

    def layernorm(z, gamma, beta):
        # z is exactly zero in the padded feature columns (inputs, weights and
        # biases are zero-padded), so only the centered term needs masking.
        mu = jnp.sum(z, axis=-1, keepdims=True) * inv_k
        d = z - mu
        if needs_mask:
            col = jax.lax.broadcasted_iota(jnp.int32, (1, padded_k), 1)
            d = d * (col < true_k).astype(f32)
        var = jnp.sum(d * d, axis=-1, keepdims=True) * inv_k
        return d * jax.lax.rsqrt(var + eps) * gamma + beta

    @pl.when(hj == 0)
    def _init():
        q = q_ref[...].astype(f32)
        x = q + k_ref[...].astype(f32) + v_ref[...].astype(f32)
        x_scr[...] = x
        # norm1(x + queries); LayerNorm math stays f32 on all generations.
        h_scr[...] = layernorm(x + q, g1_ref[...], be1_ref[...]).astype(jnp.bfloat16)
        acc_scr[...] = jnp.zeros_like(acc_scr)

    # MLP streamed over hidden tiles:  acc += relu(h @ W1_t + b1_t) @ W2_t
    # bf16 MXU operands, f32 accumulation; ReLU output cast straight to bf16.
    u = jnp.dot(h_scr[...], w1_ref[...], preferred_element_type=jnp.float32)
    u = jnp.maximum(u + b1_ref[...], 0.0).astype(jnp.bfloat16)
    acc_scr[...] += jnp.dot(u, w2_ref[...], preferred_element_type=jnp.float32)

    @pl.when(hj == pl.num_programs(1) - 1)
    def _finalize():
        y = acc_scr[...] + b2_ref[...]
        o_ref[...] = layernorm(x_scr[...] + y, g2_ref[...], be2_ref[...]).astype(o_ref.dtype)


def prepare_params(params, k):
    """One-time padding / bf16 casting of the weights (hoisted out of forward)."""
    h = params["w1"].shape[1]
    kp = _round_up(k, _LANE)
    hp = _round_up(h, _LANE)
    f32 = jnp.float32

    def pad2(a, rows, cols):
        return jnp.pad(a, ((0, rows - a.shape[0]), (0, cols - a.shape[1])))

    return {
        "g1": pad2(params["g1"].reshape(1, k).astype(f32), 1, kp),
        "be1": pad2(params["be1"].reshape(1, k).astype(f32), 1, kp),
        "g2": pad2(params["g2"].reshape(1, k).astype(f32), 1, kp),
        "be2": pad2(params["be2"].reshape(1, k).astype(f32), 1, kp),
        # bf16 weights feed the MXU (f32 accumulation inside the kernel).
        "w1": pad2(params["w1"].astype(f32), kp, hp).astype(jnp.bfloat16),
        "b1": pad2(params["b1"].reshape(1, h).astype(f32), 1, hp),
        "w2": pad2(params["w2"].astype(f32), hp, kp).astype(jnp.bfloat16),
        "b2": pad2(params["b2"].reshape(1, k).astype(f32), 1, kp),
    }


@functools.partial(jax.jit, static_argnames=("tm", "stream_dtype"))
def transformer_block(q, k, v, padded_params, tm=512, stream_dtype=jnp.bfloat16):
    """q, k, v: (B, T, K) f32.  padded_params: output of prepare_params()."""
    B, T, K = q.shape
    M = B * T
    Kp = padded_params["g1"].shape[1]
    Hp = padded_params["w1"].shape[1]
    assert Kp == _round_up(K, _LANE)

    budget, cap = _vmem_budget_and_cap()
    in_bytes = np.dtype(stream_dtype).itemsize
    out_bytes = q.dtype.itemsize

    M8 = _round_up(M, _ROW)
    tm = max(_ROW, min(tm, M8) // _ROW * _ROW)
    # v7x megacore: keep >=2 row tiles (when the problem is big enough) so the
    # "parallel" axis can actually split across the two TensorCores.
    if M8 >= 2 * 256:
        tm = min(tm, _round_up(-(-M8 // 2), _ROW))

    # Candidate hidden-tile widths: divisors of Hp that are multiples of 128,
    # largest first (capped so weight tiles stream instead of sitting resident).
    mult = Hp // _LANE
    th_cands = sorted(
        (d * _LANE for d in range(1, mult + 1) if mult % d == 0 and d * _LANE <= _TH_CAP),
        reverse=True,
    )

    def vmem_estimate(tm_, th_):
        nh_ = Hp // th_
        act_in = 3 * 2 * tm_ * Kp * in_bytes            # q/k/v, double-buffered
        act_out = 2 * tm_ * Kp * out_bytes              # output, double-buffered
        wbuf = 1 if nh_ == 1 else 2                     # weights single-buffered when resident
        wgt = wbuf * (2 * Kp * th_ * 2 + th_ * 4)       # W1 + W2 tiles (bf16) + b1 tile
        vec = 5 * Kp * 4                                # g1/be1/g2/be2/b2 (single-buffered)
        scr = tm_ * Kp * (4 + 2 + 4)                    # x (f32), h (bf16), acc (f32)
        live = tm_ * th_ * 6 + 4 * tm_ * Kp * 4         # u (f32 + bf16) + LN temporaries
        return act_in + act_out + wgt + vec + scr + live

    th = None
    while True:
        th = next((d for d in th_cands if vmem_estimate(tm, d) <= budget), None)
        if th is not None or tm <= _ROW:
            break
        tm = max(_ROW, (tm // 2) // _ROW * _ROW)
    if th is None:
        th = th_cands[-1]                               # smallest hidden tile
    tm = max(_ROW, tm // _ROW * _ROW)

    Mp = _round_up(M, tm)
    nh = Hp // th
    grid = (Mp // tm, nh)
    grid_m = Mp // tm

    # Stream activations in bf16 (halves HBM<->VMEM traffic on the mem-bound path).
    def pad_rows(a):
        a = a.reshape(M, K).astype(stream_dtype)
        return jnp.pad(a, ((0, Mp - M), (0, Kp - K)))

    qp, kp2, vp = pad_rows(q), pad_rows(k), pad_rows(v)
    p = padded_params

    row_spec = pl.BlockSpec((tm, Kp), lambda i, j: (i, 0))
    out_spec = pl.BlockSpec((tm, Kp), lambda i, j: (i, 0))
    vec_spec = _spec((1, Kp), lambda i, j: (0, 0), buffers=1)     # constant-index
    w_buffers = 1 if nh == 1 else None                            # single-buffer resident weights
    w1_spec = _spec((Kp, th), lambda i, j: (0, j), buffers=w_buffers)
    b1_spec = _spec((1, th), lambda i, j: (0, j), buffers=w_buffers)
    w2_spec = _spec((th, Kp), lambda i, j: (j, 0), buffers=w_buffers)

    flops = 4 * Mp * Kp * Hp + 20 * Mp * Kp
    w_bytes = 2 * Kp * Hp * 2 + Hp * 4
    bytes_accessed = (3 * Mp * Kp * in_bytes + Mp * Kp * out_bytes
                      + (w_bytes if nh == 1 else grid_m * w_bytes) + 5 * Kp * 4)
    cost = pl.CostEstimate(flops=flops, transcendentals=2 * Mp,
                           bytes_accessed=bytes_accessed)

    vmem_limit = int(min(cap - (4 << 20), max(2 * vmem_estimate(tm, th), 32 << 20)))

    kernel = functools.partial(transformer_block_kernel, true_k=K, padded_k=Kp)

    out = pl.pallas_call(
        kernel,
        out_shape=jax.ShapeDtypeStruct((Mp, Kp), q.dtype),
        grid_spec=pltpu.PrefetchScalarGridSpec(
            num_scalar_prefetch=0,
            grid=grid,
            in_specs=[
                row_spec, row_spec, row_spec,        # q, k, v (bf16 streamed)
                vec_spec, vec_spec,                  # gamma1, beta1
                w1_spec, b1_spec,                    # W1, b1 (hidden-tiled)
                w2_spec, vec_spec,                   # W2 (hidden-tiled), b2
                vec_spec, vec_spec,                  # gamma2, beta2
            ],
            out_specs=out_spec,
            scratch_shapes=[
                pltpu.VMEM((tm, Kp), jnp.float32),   # x = q + k + v (residual)
                pltpu.VMEM((tm, Kp), jnp.bfloat16),  # h = norm1(x + q), MXU operand
                pltpu.VMEM((tm, Kp), jnp.float32),   # MLP accumulator
            ],
        ),
        compiler_params=pltpu.CompilerParams(
            dimension_semantics=("parallel", "arbitrary"),
            vmem_limit_bytes=vmem_limit,
        ),
        cost_estimate=cost,
    )(qp, kp2, vp, p["g1"], p["be1"], p["w1"], p["b1"], p["w2"], p["b2"],
      p["g2"], p["be2"])

    return out[:M, :K].reshape(B, T, K)


def init_params(key, n, k):
    """Deterministic synthetic parameters matching the module's shapes."""
    k1, k2 = jax.random.split(key)
    h = n * k
    return {
        # LayerNorm defaults: weight=1, bias=0 (eps=1e-5)
        "g1": jnp.ones((k,), jnp.float32),
        "be1": jnp.zeros((k,), jnp.float32),
        "g2": jnp.ones((k,), jnp.float32),
        "be2": jnp.zeros((k,), jnp.float32),
        # Linear weights, stored as (in, out)
        "w1": jax.random.normal(k1, (k, h), jnp.float32) * 0.05,
        "b1": jnp.zeros((h,), jnp.float32),
        "w2": jax.random.normal(k2, (h, k), jnp.float32) * 0.05,
        "b2": jnp.zeros((k,), jnp.float32),
    }


def reference(q, k, v, params, eps=1e-5):
    """Pure-JAX (f32) reference of the PyTorch forward."""
    def ln(z, g, b):
        mu = jnp.mean(z, axis=-1, keepdims=True)
        var = jnp.mean((z - mu) ** 2, axis=-1, keepdims=True)
        return (z - mu) * jax.lax.rsqrt(var + eps) * g + b

    x = q + k + v
    h = ln(x + q, params["g1"], params["be1"])
    u = jnp.maximum(h @ params["w1"] + params["b1"], 0.0)
    y = u @ params["w2"] + params["b2"]
    return ln(x + y, params["g2"], params["be2"])


if __name__ == "__main__":
    # Small shapes: batch=2, seq=8, embedding k=32, hidden mult n=4, heads=4.
    B, T, K, N, HEADS = 2, 8, 32, 4, 4

    root = jax.random.PRNGKey(0)
    kq, kk, kv, kparam = jax.random.split(root, 4)
    q = jax.random.normal(kq, (B, T, K), jnp.float32)
    k = jax.random.normal(kk, (B, T, K), jnp.float32)
    v = jax.random.normal(kv, (B, T, K), jnp.float32)

    params = init_params(kparam, N, K)
    padded = prepare_params(params, K)      # one-time weight pad + bf16 cast

    out = jax.block_until_ready(transformer_block(q, k, v, padded))
    ref = reference(q, k, v, params)

    assert out.shape == (B, T, K)
    # bf16-streamed activations + bf16 MXU operands (f32 accumulation and f32
    # LayerNorm math) -> bf16-level tolerance vs the f32 reference.
    max_err = float(jnp.max(jnp.abs(out - ref)))
    assert max_err < 5e-2, f"mismatch vs reference: {max_err}"

    print("KERNEL_OK")
</pallas_src>

<mosaic_0001>
module attributes {stable_mosaic.version = 11 : i64} {
  func.func @transformer_block_kernel(%arg0: i32, %arg1: i32, %arg2: memref<16x128xbf16, #tpu.memory_space<vmem>>, %arg3: memref<16x128xbf16, #tpu.memory_space<vmem>>, %arg4: memref<16x128xbf16, #tpu.memory_space<vmem>>, %arg5: memref<1x128xf32, #tpu.memory_space<vmem>>, %arg6: memref<1x128xf32, #tpu.memory_space<vmem>>, %arg7: memref<128x128xbf16, #tpu.memory_space<vmem>>, %arg8: memref<1x128xf32, #tpu.memory_space<vmem>>, %arg9: memref<128x128xbf16, #tpu.memory_space<vmem>>, %arg10: memref<1x128xf32, #tpu.memory_space<vmem>>, %arg11: memref<1x128xf32, #tpu.memory_space<vmem>>, %arg12: memref<1x128xf32, #tpu.memory_space<vmem>>, %arg13: memref<16x128xf32, #tpu.memory_space<vmem>>, %arg14: memref<16x128xf32, #tpu.memory_space<vmem>>, %arg15: memref<16x128xbf16, #tpu.memory_space<vmem>>, %arg16: memref<16x128xf32, #tpu.memory_space<vmem>>) attributes {dimension_semantics = [#tpu.dimension_semantics<parallel>, #tpu.dimension_semantics<arbitrary>], iteration_bounds = array<i64: 1, 1>, scalar_prefetch = 0 : i64, scratch_operands = 3 : i64, tpu.core_type = #tpu.core_type<tc>, window_params = [{transform_indices = @transform_0, window_bounds = array<i64: 16, 128>}, {transform_indices = @transform_1, window_bounds = array<i64: 16, 128>}, {transform_indices = @transform_2, window_bounds = array<i64: 16, 128>}, {pipeline_mode = #tpu.pipeline_mode<synchronous>, transform_indices = @transform_3, window_bounds = array<i64: 1, 128>}, {pipeline_mode = #tpu.pipeline_mode<synchronous>, transform_indices = @transform_4, window_bounds = array<i64: 1, 128>}, {pipeline_mode = #tpu.pipeline_mode<synchronous>, transform_indices = @transform_5, window_bounds = array<i64: 128, 128>}, {pipeline_mode = #tpu.pipeline_mode<synchronous>, transform_indices = @transform_6, window_bounds = array<i64: 1, 128>}, {pipeline_mode = #tpu.pipeline_mode<synchronous>, transform_indices = @transform_7, window_bounds = array<i64: 128, 128>}, {pipeline_mode = #tpu.pipeline_mode<synchronous>, transform_indices = @transform_8, window_bounds = array<i64: 1, 128>}, {pipeline_mode = #tpu.pipeline_mode<synchronous>, transform_indices = @transform_9, window_bounds = array<i64: 1, 128>}, {pipeline_mode = #tpu.pipeline_mode<synchronous>, transform_indices = @transform_10, window_bounds = array<i64: 1, 128>}, {transform_indices = @transform_11, window_bounds = array<i64: 16, 128>}]} {
    %c0_i32 = arith.constant 0 : i32
    %0 = arith.cmpi eq, %arg1, %c0_i32 : i32
    %1 = arith.extui %0 : i1 to i32
    %c0_i32_0 = arith.constant 0 : i32
    %2 = arith.cmpi ne, %1, %c0_i32_0 : i32
    scf.if %2 {
      %c0_16 = arith.constant 0 : index
      %c0_17 = arith.constant 0 : index
      %20 = vector.load %arg2[%c0_16, %c0_17] : memref<16x128xbf16, #tpu.memory_space<vmem>>, vector<16x128xbf16>
      %21 = arith.extf %20 : vector<16x128xbf16> to vector<16x128xf32>
      %c0_18 = arith.constant 0 : index
      %c0_19 = arith.constant 0 : index
      %22 = vector.load %arg3[%c0_18, %c0_19] : memref<16x128xbf16, #tpu.memory_space<vmem>>, vector<16x128xbf16>
      %23 = arith.extf %22 : vector<16x128xbf16> to vector<16x128xf32>
      %24 = arith.addf %21, %23 : vector<16x128xf32>
      %c0_20 = arith.constant 0 : index
      %c0_21 = arith.constant 0 : index
      %25 = vector.load %arg4[%c0_20, %c0_21] : memref<16x128xbf16, #tpu.memory_space<vmem>>, vector<16x128xbf16>
      %26 = arith.extf %25 : vector<16x128xbf16> to vector<16x128xf32>
      %27 = arith.addf %24, %26 : vector<16x128xf32>
      %c0_22 = arith.constant 0 : index
      %c0_23 = arith.constant 0 : index
      %28 = vector.load %arg14[%c0_22, %c0_23] : memref<16x128xf32, #tpu.memory_space<vmem>>, vector<16x128xf32>
      tpu.vector_store %arg14[%c0_22, %c0_23], %27 {strides = array<i32>} : memref<16x128xf32, #tpu.memory_space<vmem>>, vector<16x128xf32>,
      %29 = arith.addf %27, %21 : vector<16x128xf32>
      %c0_24 = arith.constant 0 : index
      %c0_25 = arith.constant 0 : index
      %30 = vector.load %arg5[%c0_24, %c0_25] : memref<1x128xf32, #tpu.memory_space<vmem>>, vector<1x128xf32>
      %c0_26 = arith.constant 0 : index
      %c0_27 = arith.constant 0 : index
      %31 = vector.load %arg6[%c0_26, %c0_27] : memref<1x128xf32, #tpu.memory_space<vmem>>, vector<1x128xf32>
      %cst_28 = arith.constant dense<0.000000e+00> : vector<16xf32>
      %32 = vector.multi_reduction <add>, %29, %cst_28 [1] : vector<16x128xf32> to vector<16xf32>
      %33 = vector.shape_cast %32 : vector<16xf32> to vector<16x1xf32>
      %cst_29 = arith.constant 3.125000e-02 : f32
      %34 = vector.broadcast %cst_29 : f32 to vector<16x1xf32>
      %35 = arith.mulf %33, %34 : vector<16x1xf32>
      %36 = vector.broadcast %35 : vector<16x1xf32> to vector<16x128xf32>
      %37 = arith.subf %29, %36 : vector<16x128xf32>
      %38 = tpu.iota {dimensions = array<i32: 1>} : vector<1x128xi32>
      %c32_i32 = arith.constant 32 : i32
      %39 = vector.broadcast %c32_i32 : i32 to vector<1x128xi32>
      %40 = arith.cmpi slt, %38, %39 : vector<1x128xi32>
      %41 = arith.extui %40 : vector<1x128xi1> to vector<1x128xi32>
      %42 = arith.sitofp %41 : vector<1x128xi32> to vector<1x128xf32>
      %43 = vector.broadcast %42 : vector<1x128xf32> to vector<16x128xf32>
      %44 = arith.mulf %37, %43 : vector<16x128xf32>
      %45 = arith.mulf %44, %44 : vector<16x128xf32>
      %cst_30 = arith.constant dense<0.000000e+00> : vector<16xf32>
      %46 = vector.multi_reduction <add>, %45, %cst_30 [1] : vector<16x128xf32> to vector<16xf32>
      %47 = vector.shape_cast %46 : vector<16xf32> to vector<16x1xf32>
      %cst_31 = arith.constant 3.125000e-02 : f32
      %48 = vector.broadcast %cst_31 : f32 to vector<16x1xf32>
      %49 = arith.mulf %47, %48 : vector<16x1xf32>
      %cst_32 = arith.constant 9.99999974E-6 : f32
      %50 = vector.broadcast %cst_32 : f32 to vector<16x1xf32>
      %51 = arith.addf %49, %50 : vector<16x1xf32>
      %52 = math.rsqrt %51 : vector<16x1xf32>
      %53 = vector.broadcast %52 : vector<16x1xf32> to vector<16x128xf32>
      %54 = arith.mulf %44, %53 : vector<16x128xf32>
      %55 = vector.broadcast %30 : vector<1x128xf32> to vector<16x128xf32>
      %56 = arith.mulf %54, %55 : vector<16x128xf32>
      %57 = vector.broadcast %31 : vector<1x128xf32> to vector<16x128xf32>
      %58 = arith.addf %56, %57 : vector<16x128xf32>
      %59 = arith.truncf %58 : vector<16x128xf32> to vector<16x128xbf16>
      %c0_33 = arith.constant 0 : index
      %c0_34 = arith.constant 0 : index
      %60 = vector.load %arg15[%c0_33, %c0_34] : memref<16x128xbf16, #tpu.memory_space<vmem>>, vector<16x128xbf16>
      tpu.vector_store %arg15[%c0_33, %c0_34], %59 {strides = array<i32>} : memref<16x128xbf16, #tpu.memory_space<vmem>>, vector<16x128xbf16>,
      %cst_35 = arith.constant 0.000000e+00 : f32
      %61 = vector.broadcast %cst_35 : f32 to vector<16x128xf32>
      %c0_36 = arith.constant 0 : index
      %c0_37 = arith.constant 0 : index
      %62 = vector.load %arg16[%c0_36, %c0_37] : memref<16x128xf32, #tpu.memory_space<vmem>>, vector<16x128xf32>
      tpu.vector_store %arg16[%c0_36, %c0_37], %61 {strides = array<i32>} : memref<16x128xf32, #tpu.memory_space<vmem>>, vector<16x128xf32>,
    } else {
    }
    %c0 = arith.constant 0 : index
    %c0_1 = arith.constant 0 : index
    %3 = vector.load %arg15[%c0, %c0_1] : memref<16x128xbf16, #tpu.memory_space<vmem>>, vector<16x128xbf16>
    %c0_2 = arith.constant 0 : index
    %c0_3 = arith.constant 0 : index
    %4 = vector.load %arg7[%c0_2, %c0_3] : memref<128x128xbf16, #tpu.memory_space<vmem>>, vector<128x128xbf16>
    %cst = arith.constant dense<0.000000e+00> : vector<16x128xf32>
    %5 = tpu.matmul %3, %4, %cst {dimension_numbers = #tpu.dot_dimension_numbers<[1], [0], [0], [1], [0, 0, 1, 1], [], []>} : vector<16x128xbf16>, vector<128x128xbf16>, vector<16x128xf32> -> vector<16x128xf32>
    %c0_4 = arith.constant 0 : index
    %c0_5 = arith.constant 0 : index
    %6 = vector.load %arg8[%c0_4, %c0_5] : memref<1x128xf32, #tpu.memory_space<vmem>>, vector<1x128xf32>
    %7 = vector.broadcast %6 : vector<1x128xf32> to vector<16x128xf32>
    %8 = arith.addf %5, %7 : vector<16x128xf32>
    %cst_6 = arith.constant 0.000000e+00 : f32
    %9 = vector.broadcast %cst_6 : f32 to vector<16x128xf32>
    %10 = arith.maximumf %8, %9 : vector<16x128xf32>
    %11 = arith.truncf %10 : vector<16x128xf32> to vector<16x128xbf16>
    %c0_7 = arith.constant 0 : index
    %c0_8 = arith.constant 0 : index
    %12 = vector.load %arg16[%c0_7, %c0_8] : memref<16x128xf32, #tpu.memory_space<vmem>>, vector<16x128xf32>
    %c0_9 = arith.constant 0 : index
    %c0_10 = arith.constant 0 : index
    %13 = vector.load %arg9[%c0_9, %c0_10] : memref<128x128xbf16, #tpu.memory_space<vmem>>, vector<128x128xbf16>
    %cst_11 = arith.constant dense<0.000000e+00> : vector<16x128xf32>
    %14 = tpu.matmul %11, %13, %cst_11 {dimension_numbers = #tpu.dot_dimension_numbers<[1], [0], [0], [1], [0, 0, 1, 1], [], []>} : vector<16x128xbf16>, vector<128x128xbf16>, vector<16x128xf32> -> vector<16x128xf32>
    %15 = arith.addf %12, %14 : vector<16x128xf32>
    %c0_12 = arith.constant 0 : index
    %c0_13 = arith.constant 0 : index
    %16 = vector.load %arg16[%c0_12, %c0_13] : memref<16x128xf32, #tpu.memory_space<vmem>>, vector<16x128xf32>
    tpu.vector_store %arg16[%c0_12, %c0_13], %15 {strides = array<i32>} : memref<16x128xf32, #tpu.memory_space<vmem>>, vector<16x128xf32>,
    %c0_i32_14 = arith.constant 0 : i32
    %17 = arith.cmpi eq, %arg1, %c0_i32_14 : i32
    %18 = arith.extui %17 : i1 to i32
    %c0_i32_15 = arith.constant 0 : i32
    %19 = arith.cmpi ne, %18, %c0_i32_15 : i32
    scf.if %19 {
      %c0_16 = arith.constant 0 : index
      %c0_17 = arith.constant 0 : index
      %20 = vector.load %arg16[%c0_16, %c0_17] : memref<16x128xf32, #tpu.memory_space<vmem>>, vector<16x128xf32>
      %c0_18 = arith.constant 0 : index
      %c0_19 = arith.constant 0 : index
      %21 = vector.load %arg10[%c0_18, %c0_19] : memref<1x128xf32, #tpu.memory_space<vmem>>, vector<1x128xf32>
      %22 = vector.broadcast %21 : vector<1x128xf32> to vector<16x128xf32>
      %23 = arith.addf %20, %22 : vector<16x128xf32>
      %c0_20 = arith.constant 0 : index
      %c0_21 = arith.constant 0 : index
      %24 = vector.load %arg14[%c0_20, %c0_21] : memref<16x128xf32, #tpu.memory_space<vmem>>, vector<16x128xf32>
      %25 = arith.addf %24, %23 : vector<16x128xf32>
      %c0_22 = arith.constant 0 : index
      %c0_23 = arith.constant 0 : index
      %26 = vector.load %arg11[%c0_22, %c0_23] : memref<1x128xf32, #tpu.memory_space<vmem>>, vector<1x128xf32>
      %c0_24 = arith.constant 0 : index
      %c0_25 = arith.constant 0 : index
      %27 = vector.load %arg12[%c0_24, %c0_25] : memref<1x128xf32, #tpu.memory_space<vmem>>, vector<1x128xf32>
      %cst_26 = arith.constant dense<0.000000e+00> : vector<16xf32>
      %28 = vector.multi_reduction <add>, %25, %cst_26 [1] : vector<16x128xf32> to vector<16xf32>
      %29 = vector.shape_cast %28 : vector<16xf32> to vector<16x1xf32>
      %cst_27 = arith.constant 3.125000e-02 : f32
      %30 = vector.broadcast %cst_27 : f32 to vector<16x1xf32>
      %31 = arith.mulf %29, %30 : vector<16x1xf32>
      %32 = vector.broadcast %31 : vector<16x1xf32> to vector<16x128xf32>
      %33 = arith.subf %25, %32 : vector<16x128xf32>
      %34 = tpu.iota {dimensions = array<i32: 1>} : vector<1x128xi32>
      %c32_i32 = arith.constant 32 : i32
      %35 = vector.broadcast %c32_i32 : i32 to vector<1x128xi32>
      %36 = arith.cmpi slt, %34, %35 : vector<1x128xi32>
      %37 = arith.extui %36 : vector<1x128xi1> to vector<1x128xi32>
      %38 = arith.sitofp %37 : vector<1x128xi32> to vector<1x128xf32>
      %39 = vector.broadcast %38 : vector<1x128xf32> to vector<16x128xf32>
      %40 = arith.mulf %33, %39 : vector<16x128xf32>
      %41 = arith.mulf %40, %40 : vector<16x128xf32>
      %cst_28 = arith.constant dense<0.000000e+00> : vector<16xf32>
      %42 = vector.multi_reduction <add>, %41, %cst_28 [1] : vector<16x128xf32> to vector<16xf32>
      %43 = vector.shape_cast %42 : vector<16xf32> to vector<16x1xf32>
      %cst_29 = arith.constant 3.125000e-02 : f32
      %44 = vector.broadcast %cst_29 : f32 to vector<16x1xf32>
      %45 = arith.mulf %43, %44 : vector<16x1xf32>
      %cst_30 = arith.constant 9.99999974E-6 : f32
      %46 = vector.broadcast %cst_30 : f32 to vector<16x1xf32>
      %47 = arith.addf %45, %46 : vector<16x1xf32>
      %48 = math.rsqrt %47 : vector<16x1xf32>
      %49 = vector.broadcast %48 : vector<16x1xf32> to vector<16x128xf32>
      %50 = arith.mulf %40, %49 : vector<16x128xf32>
      %51 = vector.broadcast %26 : vector<1x128xf32> to vector<16x128xf32>
      %52 = arith.mulf %50, %51 : vector<16x128xf32>
      %53 = vector.broadcast %27 : vector<1x128xf32> to vector<16x128xf32>
      %54 = arith.addf %52, %53 : vector<16x128xf32>
      %c0_31 = arith.constant 0 : index
      %c0_32 = arith.constant 0 : index
      %55 = vector.load %arg13[%c0_31, %c0_32] : memref<16x128xf32, #tpu.memory_space<vmem>>, vector<16x128xf32>
      tpu.vector_store %arg13[%c0_31, %c0_32], %54 {strides = array<i32>} : memref<16x128xf32, #tpu.memory_space<vmem>>, vector<16x128xf32>,
    } else {
    }
    return
  }
  func.func @transform_0(%arg0: i32, %arg1: i32) -> (i32, i32) {
    %c0_i32 = arith.constant 0 : i32
    %c0_i32_0 = arith.constant 0 : i32
    return %arg0, %c0_i32 : i32, i32
  }
  func.func @transform_1(%arg0: i32, %arg1: i32) -> (i32, i32) {
    %c0_i32 = arith.constant 0 : i32
    %c0_i32_0 = arith.constant 0 : i32
    return %arg0, %c0_i32 : i32, i32
  }
  func.func @transform_2(%arg0: i32, %arg1: i32) -> (i32, i32) {
    %c0_i32 = arith.constant 0 : i32
    %c0_i32_0 = arith.constant 0 : i32
    return %arg0, %c0_i32 : i32, i32
  }
  func.func @transform_3(%arg0: i32, %arg1: i32) -> (i32, i32) {
    %c0_i32 = arith.constant 0 : i32
    %c0_i32_0 = arith.constant 0 : i32
    %c0_i32_1 = arith.constant 0 : i32
    return %c0_i32, %c0_i32_0 : i32, i32
  }
  func.func @transform_4(%arg0: i32, %arg1: i32) -> (i32, i32) {
    %c0_i32 = arith.constant 0 : i32
    %c0_i32_0 = arith.constant 0 : i32
    %c0_i32_1 = arith.constant 0 : i32
    return %c0_i32, %c0_i32_0 : i32, i32
  }
  func.func @transform_5(%arg0: i32, %arg1: i32) -> (i32, i32) {
    %c0_i32 = arith.constant 0 : i32
    %c0_i32_0 = arith.constant 0 : i32
    return %c0_i32, %arg1 : i32, i32
  }
  func.func @transform_6(%arg0: i32, %arg1: i32) -> (i32, i32) {
    %c0_i32 = arith.constant 0 : i32
    %c0_i32_0 = arith.constant 0 : i32
    return %c0_i32, %arg1 : i32, i32
  }
  func.func @transform_7(%arg0: i32, %arg1: i32) -> (i32, i32) {
    %c0_i32 = arith.constant 0 : i32
    %c0_i32_0 = arith.constant 0 : i32
    return %arg1, %c0_i32 : i32, i32
  }
  func.func @transform_8(%arg0: i32, %arg1: i32) -> (i32, i32) {
    %c0_i32 = arith.constant 0 : i32
    %c0_i32_0 = arith.constant 0 : i32
    %c0_i32_1 = arith.constant 0 : i32
    return %c0_i32, %c0_i32_0 : i32, i32
  }
  func.func @transform_9(%arg0: i32, %arg1: i32) -> (i32, i32) {
    %c0_i32 = arith.constant 0 : i32
    %c0_i32_0 = arith.constant 0 : i32
    %c0_i32_1 = arith.constant 0 : i32
    return %c0_i32, %c0_i32_0 : i32, i32
  }
  func.func @transform_10(%arg0: i32, %arg1: i32) -> (i32, i32) {
    %c0_i32 = arith.constant 0 : i32
    %c0_i32_0 = arith.constant 0 : i32
    %c0_i32_1 = arith.constant 0 : i32
    return %c0_i32, %c0_i32_0 : i32, i32
  }
  func.func @transform_11(%arg0: i32, %arg1: i32) -> (i32, i32) {
    %c0_i32 = arith.constant 0 : i32
    %c0_i32_0 = arith.constant 0 : i32
    return %arg0, %c0_i32 : i32, i32
  }
}

</mosaic_0001>

<llo_original>
// kernel: transformer_block.1
$region0: #{transformer_block.1}
  #allocation0 [shape = 'u32[]', space=smem, size = 0x4, offset = 0x4, fixed_abs, tag = 'smem constant byte address 0x4 - core index']
  #allocation1 [shape = 'u32[144,128]{1,0:T(1,128)}', space=vmem, size = 0x12000, scoped, tag = 'internal scratch']
  #allocation2 [shape = 'f32[16,128]{1,0:T(8,128)}', space=vmem, size = 0x2000, scoped, tag = 'scratch operand']
  #allocation3 [shape = 'bf16[16,128]{1,0:T(8,128)(2,1)}', space=vmem, size = 0x1000, scoped, tag = 'scratch operand']
  #allocation4 [shape = 'f32[16,128]{1,0:T(8,128)}', space=vmem, size = 0x2000, scoped, tag = 'scratch operand']
  %s0 = inlined_call_operand.vmem [shape: bf16[16,128], index: 0, kind: input, shape index: {}]
  %s1 = inlined_call_operand.vmem [shape: bf16[16,128], index: 1, kind: input, shape index: {}]
  %s2 = inlined_call_operand.vmem [shape: bf16[16,128], index: 2, kind: input, shape index: {}]
  %s3 = inlined_call_operand.vmem [shape: f32[1,128], index: 3, kind: input, shape index: {}]
  %s4 = inlined_call_operand.vmem [shape: f32[1,128], index: 4, kind: input, shape index: {}]
  %s5 = inlined_call_operand.vmem [shape: bf16[128,128], index: 5, kind: input, shape index: {}]
  %s6 = inlined_call_operand.hbm [shape: f32[1,128], index: 6, kind: input, shape index: {}]
  %s7 = inlined_call_operand.vmem [shape: bf16[128,128], index: 7, kind: input, shape index: {}]
  %s8 = inlined_call_operand.hbm [shape: f32[1,128], index: 8, kind: input, shape index: {}]
  %s9 = inlined_call_operand.vmem [shape: f32[1,128], index: 9, kind: input, shape index: {}]
  %s10 = inlined_call_operand.vmem [shape: f32[1,128], index: 10, kind: input, shape index: {}]
  %s11 = inlined_call_operand.vmem [shape: f32[16,128], index: 11, kind: output, shape index: {}]
  %s12 = sld [smem:[#allocation0]]
  $region70: #{transformer_block.1} parent=0
    _
  %s14 = ssub.s32 1, %s12
  %s15 = scalar_select 0, %s14, %s12
  $region1: #{transformer_block.1} parent=0
    #allocation5 [shape = 'u8[512]{0}', space=vmem, size = 0x400, scoped, tag = 'input window, operand 6, single buffered']
    #allocation6 [shape = 's32[1]{0}', space=sflag, size = 0x4, scoped, tag = 'scoped memory for transformer_block.1']
    #allocation7 [shape = 'u8[512]{0}', space=vmem, size = 0x400, scoped, tag = 'input window, operand 8, single buffered']
    #allocation8 [shape = 's32[1]{0}', space=sflag, size = 0x4, scoped, tag = 'scoped memory for transformer_block.1']
    %16 = vsyncpa [#allocation6], 0
    %17 = vsyncpa [#allocation8], 0
    // Predicated region
    $region2: #{transformer_block.1} parent=1 // pred_check
      _
    $region3: #{transformer_block.1} parent=1 // pred_check_branch
      %19 = sbr.rel (0) target = $region5
    $region4: #{transformer_block.1} parent=1 // pred_region
      _
    $region5: #{transformer_block.1} parent=1 // pred_fallthru
      _
    // Predicated region
    $region6: #{transformer_block.1} parent=1 // pred_check
      _
    $region7: #{transformer_block.1} parent=1 // pred_check_branch
      %21 = sbr.rel (0) target = $region9
    $region8: #{transformer_block.1} parent=1 // pred_region
      _
    $region9: #{transformer_block.1} parent=1 // pred_fallthru
      _
    // Predicated region
    $region10: #{transformer_block.1} parent=1 // pred_check
      _
    $region11: #{transformer_block.1} parent=1 // pred_check_branch
      %23 = sbr.rel (0) target = $region13
    $region12: #{transformer_block.1} parent=1 // pred_region
      _
    $region13: #{transformer_block.1} parent=1 // pred_fallthru
      _
    // Predicated region
    $region14: #{transformer_block.1} parent=1 // pred_check
      _
    $region15: #{transformer_block.1} parent=1 // pred_check_branch
      %25 = sbr.rel (0) target = $region17
    $region16: #{transformer_block.1} parent=1 // pred_region
      _
    $region17: #{transformer_block.1} parent=1 // pred_fallthru
      _
    // Predicated region
    $region18: #{transformer_block.1} parent=1 // pred_check
      _
    $region19: #{transformer_block.1} parent=1 // pred_check_branch
      %27 = sbr.rel (0) target = $region21
    $region20: #{transformer_block.1} parent=1 // pred_region
      _
    $region21: #{transformer_block.1} parent=1 // pred_fallthru
      _
    // Predicated region
    $region22: #{transformer_block.1} parent=1 // pred_check
      _
    $region23: #{transformer_block.1} parent=1 // pred_check_branch
      %29 = sbr.rel (0) target = $region25
    $region24: #{transformer_block.1} parent=1 // pred_region
      _
    $region25: #{transformer_block.1} parent=1 // pred_fallthru
      _
    // Predicated region
    $region26: #{transformer_block.1} parent=1 // pred_check
      _
    $region27: #{transformer_block.1} parent=1 // pred_check_branch
      %31 = sbr.rel (0) target = $region29
    $region28: #{transformer_block.1} parent=1 // pred_region
      %s33 = ssub.s32 16, 16
      %34 = vsyncadd [#allocation6], %s33
      %s36 = sshll.u32 [#allocation5], 4
      %s37 = int_to_ptr.vmem [resolvable:$true] %s36
      %39 = dma.hbm_to_vmem [thread:$0]  %s6, 16, %s37, [#allocation6]
    $region29: #{transformer_block.1} parent=1 // pred_fallthru
      _
    // Predicated region
    $region30: #{transformer_block.1} parent=1 // pred_check
      _
    $region31: #{transformer_block.1} parent=1 // pred_check_branch
      %41 = sbr.rel (0) target = $region33
    $region32: #{transformer_block.1} parent=1 // pred_region
      _
    $region33: #{transformer_block.1} parent=1 // pred_fallthru
      _
    // Predicated region
    $region34: #{transformer_block.1} parent=1 // pred_check
      _
    $region35: #{transformer_block.1} parent=1 // pred_check_branch
      %43 = sbr.rel (0) target = $region37
    $region36: #{transformer_block.1} parent=1 // pred_region
      %s45 = ssub.s32 16, 16
      %46 = vsyncadd [#allocation8], %s45
      %s48 = sshll.u32 [#allocation7], 4
      %s49 = int_to_ptr.vmem [resolvable:$true] %s48
      %51 = dma.hbm_to_vmem [thread:$0]  %s8, 16, %s49, [#allocation8]
    $region37: #{transformer_block.1} parent=1 // pred_fallthru
      _
    // Predicated region
    $region38: #{transformer_block.1} parent=1 // pred_check
      _
    $region39: #{transformer_block.1} parent=1 // pred_check_branch
      %53 = sbr.rel (0) target = $region41
    $region40: #{transformer_block.1} parent=1 // pred_region
      _
    $region41: #{transformer_block.1} parent=1 // pred_fallthru
      _
    // Predicated region
    $region42: #{transformer_block.1} parent=1 // pred_check
      _
    $region43: #{transformer_block.1} parent=1 // pred_check_branch
      %55 = sbr.rel (0) target = $region45
    $region44: #{transformer_block.1} parent=1 // pred_region
      _
    $region45: #{transformer_block.1} parent=1 // pred_fallthru
      _
    // Predicated region
    $region46: #{transformer_block.1} parent=1 // pred_check
      _
    $region47: #{transformer_block.1} parent=1 // pred_check_branch
      %57 = sbr.rel (0) target = $region49
    $region48: #{transformer_block.1} parent=1 // pred_region
      %58 = dma.done [#allocation6], 16
    $region49: #{transformer_block.1} parent=1 // pred_fallthru
      _
    // Predicated region
    $region50: #{transformer_block.1} parent=1 // pred_check
      _
    $region51: #{transformer_block.1} parent=1 // pred_check_branch
      %60 = sbr.rel (0) target = $region53
    $region52: #{transformer_block.1} parent=1 // pred_region
      %61 = dma.done [#allocation8], 16
    $region53: #{transformer_block.1} parent=1 // pred_fallthru
      _
    %p63 = scmp.eq.s32.totalorder 0, 0
    // Predicated region
    $region54: #{transformer_block.1} parent=1 // pred_check
      %p64 = pneg %p63
    $region55: #{transformer_block.1} parent=1 // pred_check_branch
      %66 = sbr.rel (%p64) target = $region57
    $region56: #{transformer_block.1} parent=1 // pred_region
      %v67 = vld [vmem:[%s0] sm:$0xf]
      %v68 = vld [vmem:[%s0 + $0x4] sm:$0xf]
      %v69 = vunpack.c.l.bf16 %v67
      %v70 = vunpack.c.l.bf16 %v68
      %v71 = vld [vmem:[%s1] sm:$0xf]
      %v72 = vld [vmem:[%s1 + $0x4] sm:$0xf]
      %v73 = vunpack.c.l.bf16 %v71
      %v74 = vunpack.c.l.bf16 %v72
      %v75 = vadd.f32 %v69, %v73
      %v76 = vadd.f32 %v70, %v74
      %v77 = vld [vmem:[%s2] sm:$0xf]
      %v78 = vld [vmem:[%s2 + $0x4] sm:$0xf]
      %v79 = vunpack.c.l.bf16 %v77
      %v80 = vunpack.c.l.bf16 %v78
      %v81 = vadd.f32 %v75, %v79
      %v82 = vadd.f32 %v76, %v80
      %83 = vst [vmem:[#allocation2] sm:$0xff] %v81
      %84 = vst [vmem:[#allocation2 + $0x8] sm:$0xff] %v82
      %v85 = vadd.f32 %v81, %v69
      %v86 = vadd.f32 %v82, %v70
      %v87 = vld [vmem:[%s3] sm:$0x1]
      %v88 = vld [vmem:[%s4] sm:$0x1]
      %89 = vadd.xlane.f32.xlu0 %v85
      %v90 = vpop.xlane.xlu0 %89
      %91 = vadd.xlane.f32.xlu0 %v86
      %v92 = vpop.xlane.xlu0 %91
      %v93 = vmul.f32 %v90, 0.03125
      %v94 = vmul.f32 %v92, 0.03125
      %v95 = vsub.f32 %v85, %v93
      %v96 = vsub.f32 %v86, %v94
      %v97 = vlaneseq
      %v98 = vand.u32 %v97, 127
      %vm99 = vcmp.lt.s32.totalorder %v98, 32
      %v100 = vsel %vm99, 1, 0
      %v101 = vcvt.s32.f32 %v100
      %v102 = vmul.f32 %v95, %v101
      %v103 = vmul.f32 %v96, %v101
      %v104 = vmul.f32 %v102, %v102
      %v105 = vmul.f32 %v103, %v103
      %106 = vadd.xlane.f32.xlu0 %v104
      %v107 = vpop.xlane.xlu0 %106
      %108 = vadd.xlane.f32.xlu0 %v105
      %v109 = vpop.xlane.xlu0 %108
      %v110 = vmul.f32 %v107, 0.03125
      %v111 = vmul.f32 %v109, 0.03125
      %v112 = vadd.f32 %v110, 1e-05
      %v113 = vadd.f32 %v111, 1e-05
      %v114 = vrsqrt.pop %v112
      %v115 = vrsqrt.pop %v113
      %v116 = vmul.f32 %v102, %v114
      %v117 = vmul.f32 %v103, %v115
      %v119 = vlaneseq
      %v120 = vshrl.u32 %v119, 7
      %v121 = vsub.s32 0, %v120
      %v122 = vrot.slane %v87, %v121
      %v124 = vmul.f32 %v116, %v122
      %v125 = vmul.f32 %v117, %v122
      %v127 = vlaneseq
      %v128 = vshrl.u32 %v127, 7
      %v129 = vsub.s32 0, %v128
      %v130 = vrot.slane %v88, %v129
      %v132 = vadd.f32 %v124, %v130
      %v133 = vadd.f32 %v125, %v130
      %v134 = vpack.c.bf16 %v133, %v132
      %v136 = vunpack.c.l.b16 %v134
      %v137 = vunpack.c.h.b16 %v134
      %v138 = vpack.c.b16 %v136, %v136
      %v139 = vpack.c.b16 %v137, %v137
      %142 = vst [vmem:[#allocation3] sm:$0xf] %v138
      %143 = vst [vmem:[#allocation3 + $0x4] sm:$0xf] %v139
      %144 = vst [vmem:[#allocation4] sm:$0xff] 0.0
      %145 = vst [vmem:[#allocation4 + $0x8] sm:$0xff] 0.0
    $region57: #{transformer_block.1} parent=1 // pred_fallthru
      _
    %v146 = vld [vmem:[#allocation3] sm:$0xf]
    %v147 = vld [vmem:[#allocation3 + $0x4] sm:$0xf]
    %v148 = vld [vmem:[%s5] sm:$0xf]
    %v149 = vld [vmem:[%s5 + $0x4] sm:$0xf]
    %v150 = vld [vmem:[%s5 + $0x8] sm:$0xf]
    %v151 = vld [vmem:[%s5 + $0xc] sm:$0xf]
    %v152 = vld [vmem:[%s5 + $0x10] sm:$0xf]
    %v153 = vld [vmem:[%s5 + $0x14] sm:$0xf]
    %v154 = vld [vmem:[%s5 + $0x18] sm:$0xf]
    %v155 = vld [vmem:[%s5 + $0x1c] sm:$0xf]
    %v156 = vld [vmem:[%s5 + $0x20] sm:$0xf]
    %v157 = vld [vmem:[%s5 + $0x24] sm:$0xf]
    %v158 = vld [vmem:[%s5 + $0x28] sm:$0xf]
    %v159 = vld [vmem:[%s5 + $0x2c] sm:$0xf]
    %v160 = vld [vmem:[%s5 + $0x30] sm:$0xf]
    %v161 = vld [vmem:[%s5 + $0x34] sm:$0xf]
    %v162 = vld [vmem:[%s5 + $0x38] sm:$0xf]
    %v163 = vld [vmem:[%s5 + $0x3c] sm:$0xf]
    %v164 = vld [vmem:[#allocation5] sm:$0x1]
    %v166 = vlaneseq
    %v167 = vshrl.u32 %v166, 7
    %v168 = vsub.s32 0, %v167
    %v169 = vrot.slane %v164, %v168
    %v173 = vunpack.c.l.b16 %v146
    %v174 = vunpack.c.l.b16 %v147
    %v175 = vpack.c.b16 %v174, %v173
    %v193 = vunpack.c.l.b16 %v148
    %v194 = vunpack.c.l.b16 %v149
    %v195 = vunpack.c.l.b16 %v150
    %v196 = vunpack.c.l.b16 %v151
    %v197 = vunpack.c.l.b16 %v152
    %v198 = vunpack.c.l.b16 %v153
    %v199 = vunpack.c.l.b16 %v154
    %v200 = vunpack.c.l.b16 %v155
    %v201 = vunpack.c.l.b16 %v156
    %v202 = vunpack.c.l.b16 %v157
    %v203 = vunpack.c.l.b16 %v158
    %v204 = vunpack.c.l.b16 %v159
    %v205 = vunpack.c.l.b16 %v160
    %v206 = vunpack.c.l.b16 %v161
    %v207 = vunpack.c.l.b16 %v162
    %v208 = vunpack.c.l.b16 %v163
    %v209 = vpack.c.b16 %v194, %v193
    %v210 = vpack.c.b16 %v196, %v195
    %v211 = vpack.c.b16 %v198, %v197
    %v212 = vpack.c.b16 %v200, %v199
    %v213 = vpack.c.b16 %v202, %v201
    %v214 = vpack.c.b16 %v204, %v203
    %v215 = vpack.c.b16 %v206, %v205
    %v216 = vpack.c.b16 %v208, %v207
    %225 = vmatprep.subr.bf16.mxu0 0
    %226 = vmatpush1.bf16.msra.mxu0 %v216
    %227 = vmatprep.subr.bf16.mxu0 0
    %228 = vmatpush1.bf16.msra.mxu0 %v215
    %229 = vmatprep.subr.bf16.mxu0 0
    %230 = vmatpush1.bf16.msra.mxu0 %v214
    %231 = vmatprep.subr.bf16.mxu0 0
    %232 = vmatpush1.bf16.msra.mxu0 %v213
    %233 = vmatprep.subr.bf16.mxu0 0
    %234 = vmatpush1.bf16.msra.mxu0 %v212
    %235 = vmatprep.subr.bf16.mxu0 0
    %236 = vmatpush1.bf16.msra.mxu0 %v211
    %237 = vmatprep.subr.bf16.mxu0 0
    %238 = vmatpush1.bf16.msra.mxu0 %v210
    %239 = vmatprep.subr.bf16.mxu0 0
    %240 = vmatpush1.bf16.msra.mxu0 %v209
    %241 = vmatprep.subr.bf16.mxu0 0
    %242 = vmatpush2.bf16.msra.mxu0 0
    %243 = vmatprep.subr.bf16.mxu0 0
    %244 = vmatpush2.bf16.msra.mxu0 0
    %245 = vmatprep.subr.bf16.mxu0 0
    %246 = vmatpush2.bf16.msra.mxu0 0
    %247 = vmatprep.subr.bf16.mxu0 0
    %248 = vmatpush2.bf16.msra.mxu0 0
    %249 = vmatprep.subr.bf16.mxu0 0
    %250 = vmatpush2.bf16.msra.mxu0 0
    %251 = vmatprep.subr.bf16.mxu0 0
    %252 = vmatpush2.bf16.msra.mxu0 0
    %253 = vmatprep.subr.bf16.mxu0 0
    %254 = vmatpush2.bf16.msra.mxu0 0
    %255 = vmatprep.subr.bf16.mxu0 0
    %256 = vmatpush2.bf16.msra.mxu0 0
    %257 = vmatprep.mubr.bf16.mxu0 0
    %258 = vmatmul.mubr.bf16.gmra.mxu0 %v175
    %v259 = vpop.f32.mrf.mxu0
    %v260 = vadd.f32 %v169, %v259
    %v261 = vpop.f32.mrf.mxu0
    %v262 = vpop.f32.mrf.mxu0
    %v263 = vadd.f32 %v169, %v262
    %v264 = vpop.f32.mrf.mxu0
    %265 = vdwg.mxu0
    %v266 = vmax.f32 %v260, 0.0
    %v267 = vmax.f32 %v263, 0.0
    %v268 = vpack.c.bf16 %v267, %v266
    %v269 = vld [vmem:[#allocation4] sm:$0xff]
    %v270 = vld [vmem:[#allocation4 + $0x8] sm:$0xff]
    %v271 = vld [vmem:[%s7] sm:$0xf]
    %v272 = vld [vmem:[%s7 + $0x4] sm:$0xf]
    %v273 = vld [vmem:[%s7 + $0x8] sm:$0xf]
    %v274 = vld [vmem:[%s7 + $0xc] sm:$0xf]
    %v275 = vld [vmem:[%s7 + $0x10] sm:$0xf]
    %v276 = vld [vmem:[%s7 + $0x14] sm:$0xf]
    %v277 = vld [vmem:[%s7 + $0x18] sm:$0xf]
    %v278 = vld [vmem:[%s7 + $0x1c] sm:$0xf]
    %v279 = vld [vmem:[%s7 + $0x20] sm:$0xf]
    %v280 = vld [vmem:[%s7 + $0x24] sm:$0xf]
    %v281 = vld [vmem:[%s7 + $0x28] sm:$0xf]
    %v282 = vld [vmem:[%s7 + $0x2c] sm:$0xf]
    %v283 = vld [vmem:[%s7 + $0x30] sm:$0xf]
    %v284 = vld [vmem:[%s7 + $0x34] sm:$0xf]
    %v285 = vld [vmem:[%s7 + $0x38] sm:$0xf]
    %v286 = vld [vmem:[%s7 + $0x3c] sm:$0xf]
    %v303 = vunpack.c.l.b16 %v271
    %v304 = vunpack.c.l.b16 %v272
    %v305 = vunpack.c.l.b16 %v273
    %v306 = vunpack.c.l.b16 %v274
    %v307 = vunpack.c.l.b16 %v275
    %v308 = vunpack.c.l.b16 %v276
    %v309 = vunpack.c.l.b16 %v277
    %v310 = vunpack.c.l.b16 %v278
    %v311 = vunpack.c.l.b16 %v279
    %v312 = vunpack.c.l.b16 %v280
    %v313 = vunpack.c.l.b16 %v281
    %v314 = vunpack.c.l.b16 %v282
    %v315 = vunpack.c.l.b16 %v283
    %v316 = vunpack.c.l.b16 %v284
    %v317 = vunpack.c.l.b16 %v285
    %v318 = vunpack.c.l.b16 %v286
    %v319 = vpack.c.b16 %v304, %v303
    %v320 = vpack.c.b16 %v306, %v305
    %v321 = vpack.c.b16 %v308, %v307
    %v322 = vpack.c.b16 %v310, %v309
    %v323 = vpack.c.b16 %v312, %v311
    %v324 = vpack.c.b16 %v314, %v313
    %v325 = vpack.c.b16 %v316, %v315
    %v326 = vpack.c.b16 %v318, %v317
    %335 = vmatprep.subr.bf16.mxu0 0
    %336 = vmatpush1.bf16.msra.mxu0 %v326
    %337 = vmatprep.subr.bf16.mxu0 0
    %338 = vmatpush1.bf16.msra.mxu0 %v325
    %339 = vmatprep.subr.bf16.mxu0 0
    %340 = vmatpush1.bf16.msra.mxu0 %v324
    %341 = vmatprep.subr.bf16.mxu0 0
    %342 = vmatpush1.bf16.msra.mxu0 %v323
    %343 = vmatprep.subr.bf16.mxu0 0
    %344 = vmatpush1.bf16.msra.mxu0 %v322
    %345 = vmatprep.subr.bf16.mxu0 0
    %346 = vmatpush1.bf16.msra.mxu0 %v321
    %347 = vmatprep.subr.bf16.mxu0 0
    %348 = vmatpush1.bf16.msra.mxu0 %v320
    %349 = vmatprep.subr.bf16.mxu0 0
    %350 = vmatpush1.bf16.msra.mxu0 %v319
    %351 = vmatprep.subr.bf16.mxu0 0
    %352 = vmatpush2.bf16.msra.mxu0 0
    %353 = vmatprep.subr.bf16.mxu0 0
    %354 = vmatpush2.bf16.msra.mxu0 0
    %355 = vmatprep.subr.bf16.mxu0 0
    %356 = vmatpush2.bf16.msra.mxu0 0
    %357 = vmatprep.subr.bf16.mxu0 0
    %358 = vmatpush2.bf16.msra.mxu0 0
    %359 = vmatprep.subr.bf16.mxu0 0
    %360 = vmatpush2.bf16.msra.mxu0 0
    %361 = vmatprep.subr.bf16.mxu0 0
    %362 = vmatpush2.bf16.msra.mxu0 0
    %363 = vmatprep.subr.bf16.mxu0 0
    %364 = vmatpush2.bf16.msra.mxu0 0
    %365 = vmatprep.subr.bf16.mxu0 0
    %366 = vmatpush2.bf16.msra.mxu0 0
    %367 = vmatprep.mubr.bf16.mxu0 0
    %368 = vmatmul.mubr.bf16.gmra.mxu0 %v268
    %v369 = vpop.f32.mrf.mxu0
    %v370 = vadd.f32 0.0, %v369
    %v371 = vpop.f32.mrf.mxu0
    %v372 = vpop.f32.mrf.mxu0
    %v373 = vadd.f32 0.0, %v372
    %v374 = vpop.f32.mrf.mxu0
    %375 = vdwg.mxu0
    %v376 = vadd.f32 %v269, %v370
    %v377 = vadd.f32 %v270, %v373
    %378 = vst [vmem:[#allocation4] sm:$0xff] %v376
    %379 = vst [vmem:[#allocation4 + $0x8] sm:$0xff] %v377
    // Predicated region
    $region58: #{transformer_block.1} parent=1 // pred_check
      %p380 = pneg %p63
    $region59: #{transformer_block.1} parent=1 // pred_check_branch
      %382 = sbr.rel (%p380) target = $region61
    $region60: #{transformer_block.1} parent=1 // pred_region
      %v383 = vld [vmem:[#allocation4] sm:$0xff]
      %v384 = vld [vmem:[#allocation4 + $0x8] sm:$0xff]
      %v385 = vld [vmem:[#allocation7] sm:$0x1]
      %v387 = vlaneseq
      %v388 = vshrl.u32 %v387, 7
      %v389 = vsub.s32 0, %v388
      %v390 = vrot.slane %v385, %v389
      %v392 = vadd.f32 %v383, %v390
      %v393 = vadd.f32 %v384, %v390
      %v394 = vld [vmem:[#allocation2] sm:$0xff]
      %v395 = vld [vmem:[#allocation2 + $0x8] sm:$0xff]
      %v396 = vadd.f32 %v394, %v392
      %v397 = vadd.f32 %v395, %v393
      %v398 = vld [vmem:[%s9] sm:$0x1]
      %v399 = vld [vmem:[%s10] sm:$0x1]
      %400 = vadd.xlane.f32.xlu0 %v396
      %v401 = vpop.xlane.xlu0 %400
      %402 = vadd.xlane.f32.xlu0 %v397
      %v403 = vpop.xlane.xlu0 %402
      %v404 = vmul.f32 %v401, 0.03125
      %v405 = vmul.f32 %v403, 0.03125
      %v406 = vsub.f32 %v396, %v404
      %v407 = vsub.f32 %v397, %v405
      %v408 = vlaneseq
      %v409 = vand.u32 %v408, 127
      %vm410 = vcmp.lt.s32.totalorder %v409, 32
      %v411 = vsel %vm410, 1, 0
      %v412 = vcvt.s32.f32 %v411
      %v413 = vmul.f32 %v406, %v412
      %v414 = vmul.f32 %v407, %v412
      %v415 = vmul.f32 %v413, %v413
      %v416 = vmul.f32 %v414, %v414
      %417 = vadd.xlane.f32.xlu0 %v415
      %v418 = vpop.xlane.xlu0 %417
      %419 = vadd.xlane.f32.xlu0 %v416
      %v420 = vpop.xlane.xlu0 %419
      %v421 = vmul.f32 %v418, 0.03125
      %v422 = vmul.f32 %v420, 0.03125
      %v423 = vadd.f32 %v421, 1e-05
      %v424 = vadd.f32 %v422, 1e-05
      %v425 = vrsqrt.pop %v423
      %v426 = vrsqrt.pop %v424
      %v427 = vmul.f32 %v413, %v425
      %v428 = vmul.f32 %v414, %v426
      %v430 = vlaneseq
      %v431 = vshrl.u32 %v430, 7
      %v432 = vsub.s32 0, %v431
      %v433 = vrot.slane %v398, %v432
      %v435 = vmul.f32 %v427, %v433
      %v436 = vmul.f32 %v428, %v433
      %v438 = vlaneseq
      %v439 = vshrl.u32 %v438, 7
      %v440 = vsub.s32 0, %v439
      %v441 = vrot.slane %v399, %v440
      %v443 = vadd.f32 %v435, %v441
      %v444 = vadd.f32 %v436, %v441
      %445 = vst [vmem:[%s11] sm:$0xff] %v443
      %446 = vst [vmem:[%s11 + $0x8] sm:$0xff] %v444
    $region61: #{transformer_block.1} parent=1 // pred_fallthru
      _
    // Predicated region
    $region62: #{transformer_block.1} parent=1 // pred_check
      _
    $region63: #{transformer_block.1} parent=1 // pred_check_branch
      %448 = sbr.rel (0) target = $region65
    $region64: #{transformer_block.1} parent=1 // pred_region
      _
    $region65: #{transformer_block.1} parent=1 // pred_fallthru
      _
    // Predicated region
    $region66: #{transformer_block.1} parent=1 // pred_check
      _
    $region67: #{transformer_block.1} parent=1 // pred_check_branch
      %450 = sbr.rel (0) target = $region69
    $region68: #{transformer_block.1} parent=1 // pred_region
      _
    $region69: #{transformer_block.1} parent=1 // pred_fallthru
      _
    %451 = vsyncpa [#allocation6], 1
    %452 = vsyncpa [#allocation8], 1

</llo_original>
